<compile_context>
chip_gen: v6e
topology: v6e:2x2x1
jax: 0.10.0
libtpu: 0.0.40
codegen_flags: <defaults>
</compile_context>

<pallas_src>
import math

import jax
import jax.numpy as jnp
from jax.experimental import pallas as pl
from jax.experimental.pallas import tpu as pltpu

_INV_SQRT2 = 1.0 / math.sqrt(2.0)


def _erf_f32(x):
    """float32 erf via the Eigen/XLA rational approximation (VPU-only ops)."""
    x = jnp.clip(x, -4.0, 4.0)            # erf saturates to +/-1 outside [-4, 4] in f32
    x2 = x * x
    # Numerator (odd polynomial), Horner in x^2.
    p = jnp.float32(-2.72614225801306e-10)
    p = p * x2 + jnp.float32(2.77068142495902e-08)
    p = p * x2 + jnp.float32(-2.10102402082508e-06)
    p = p * x2 + jnp.float32(-5.69250639462346e-05)
    p = p * x2 + jnp.float32(-7.34990630326855e-04)
    p = p * x2 + jnp.float32(-2.95459980854025e-03)
    p = p * x2 + jnp.float32(-1.60960333262415e-02)
    p = p * x
    # Denominator (even polynomial).
    q = jnp.float32(-1.45660718464996e-05)
    q = q * x2 + jnp.float32(-2.13374055278905e-04)
    q = q * x2 + jnp.float32(-1.68282697438203e-03)
    q = q * x2 + jnp.float32(-7.37332916720468e-03)
    q = q * x2 + jnp.float32(-1.42647390514189e-02)
    return p / q


def _gelu_kernel(x_ref, o_ref):
    x = x_ref[...].astype(jnp.float32)
    y = x * 0.5 * (1.0 + _erf_f32(x * _INV_SQRT2))
    o_ref[...] = y.astype(o_ref.dtype)      # single full-tile, lane-dense store


def _round_up(n, m):
    return ((n + m - 1) // m) * m


def pallas_gelu(x, *, lanes=128, max_block_rows=256):
    """erf-based GELU of an arbitrarily shaped array via a tiled Pallas kernel."""
    orig_shape = x.shape
    flat = x.reshape(-1)
    n = flat.shape[0]

    rows = pl.cdiv(n, lanes)
    block_rows = min(max_block_rows, _round_up(rows, 8))   # (8, 128)-aligned tile
    padded_rows = _round_up(rows, block_rows)

    padded = jnp.pad(flat, (0, padded_rows * lanes - n))
    x2d = padded.reshape(padded_rows, lanes)

    out2d = pl.pallas_call(
        _gelu_kernel,
        out_shape=jax.ShapeDtypeStruct((padded_rows, lanes), x.dtype),
        grid=(padded_rows // block_rows,),
        in_specs=[pl.BlockSpec((block_rows, lanes), lambda i: (i, 0))],
        out_specs=pl.BlockSpec((block_rows, lanes), lambda i: (i, 0)),
        compiler_params=pltpu.CompilerParams(
            dimension_semantics=("parallel",)),   # shard row blocks across TCs (v7x)
    )(x2d)

    return out2d.reshape(-1)[:n].reshape(orig_shape)


def gelu_reference(x):
    # Mirrors the PyTorch module:  x * 0.5 * (1 + erf(x / sqrt(2)))
    return x * 0.5 * (1.0 + jax.scipy.special.erf(x / math.sqrt(2.0)))


if __name__ == "__main__":
    key = jax.random.PRNGKey(0)
    k1, k2 = jax.random.split(key)

    # Shapes consistent with an activation module: a small 4-D feature map and
    # a ragged (non-lane-aligned) tensor to exercise the padding path.
    x1 = 3.0 * jax.random.normal(k1, (2, 4, 16, 16), jnp.float32)
    x2 = 3.0 * jax.random.normal(k2, (3, 5, 17), jnp.float32)

    for x in (x1, x2):
        out = jax.block_until_ready(pallas_gelu(x))
        ref = jax.block_until_ready(gelu_reference(x))
        assert out.shape == x.shape
        err = float(jnp.max(jnp.abs(out - ref)))
        assert jnp.allclose(out, ref, atol=1e-5, rtol=1e-5), err

    print("KERNEL_OK")
</pallas_src>

<mosaic_0001>
module attributes {stable_mosaic.version = 11 : i64} {
  func.func @_gelu_kernel(%arg0: i32, %arg1: memref<16x128xf32, #tpu.memory_space<vmem>>, %arg2: memref<16x128xf32, #tpu.memory_space<vmem>>) attributes {dimension_semantics = [#tpu.dimension_semantics<parallel>], iteration_bounds = array<i64: 1>, scalar_prefetch = 0 : i64, scratch_operands = 0 : i64, tpu.core_type = #tpu.core_type<tc>, window_params = [{transform_indices = @transform_0, window_bounds = array<i64: 16, 128>}, {transform_indices = @transform_1, window_bounds = array<i64: 16, 128>}]} {
    %c0 = arith.constant 0 : index
    %c0_0 = arith.constant 0 : index
    %0 = vector.load %arg1[%c0, %c0_0] : memref<16x128xf32, #tpu.memory_space<vmem>>, vector<16x128xf32>
    %cst = arith.constant 5.000000e-01 : f32
    %1 = vector.broadcast %cst : f32 to vector<16x128xf32>
    %2 = arith.mulf %0, %1 : vector<16x128xf32>
    %cst_1 = arith.constant 0.707106769 : f32
    %3 = vector.broadcast %cst_1 : f32 to vector<16x128xf32>
    %4 = arith.mulf %0, %3 : vector<16x128xf32>
    %cst_2 = arith.constant -4.000000e+00 : f32
    %cst_3 = arith.constant 4.000000e+00 : f32
    %5 = vector.broadcast %cst_2 : f32 to vector<16x128xf32>
    %6 = arith.maximumf %5, %4 : vector<16x128xf32>
    %7 = vector.broadcast %cst_3 : f32 to vector<16x128xf32>
    %8 = arith.minimumf %7, %6 : vector<16x128xf32>
    %9 = arith.mulf %8, %8 : vector<16x128xf32>
    %cst_4 = arith.constant -2.72614237E-10 : f32
    %10 = vector.broadcast %cst_4 : f32 to vector<16x128xf32>
    %11 = arith.mulf %10, %9 : vector<16x128xf32>
    %cst_5 = arith.constant 2.77068146E-8 : f32
    %12 = vector.broadcast %cst_5 : f32 to vector<16x128xf32>
    %13 = arith.addf %11, %12 : vector<16x128xf32>
    %14 = arith.mulf %13, %9 : vector<16x128xf32>
    %cst_6 = arith.constant -2.10102394E-6 : f32
    %15 = vector.broadcast %cst_6 : f32 to vector<16x128xf32>
    %16 = arith.addf %14, %15 : vector<16x128xf32>
    %17 = arith.mulf %16, %9 : vector<16x128xf32>
    %cst_7 = arith.constant -5.69250624E-5 : f32
    %18 = vector.broadcast %cst_7 : f32 to vector<16x128xf32>
    %19 = arith.addf %17, %18 : vector<16x128xf32>
    %20 = arith.mulf %19, %9 : vector<16x128xf32>
    %cst_8 = arith.constant -7.34990637E-4 : f32
    %21 = vector.broadcast %cst_8 : f32 to vector<16x128xf32>
    %22 = arith.addf %20, %21 : vector<16x128xf32>
    %23 = arith.mulf %22, %9 : vector<16x128xf32>
    %cst_9 = arith.constant -2.954600e-03 : f32
    %24 = vector.broadcast %cst_9 : f32 to vector<16x128xf32>
    %25 = arith.addf %23, %24 : vector<16x128xf32>
    %26 = arith.mulf %25, %9 : vector<16x128xf32>
    %cst_10 = arith.constant -0.0160960332 : f32
    %27 = vector.broadcast %cst_10 : f32 to vector<16x128xf32>
    %28 = arith.addf %26, %27 : vector<16x128xf32>
    %29 = arith.mulf %28, %8 : vector<16x128xf32>
    %cst_11 = arith.constant -1.45660715E-5 : f32
    %30 = vector.broadcast %cst_11 : f32 to vector<16x128xf32>
    %31 = arith.mulf %30, %9 : vector<16x128xf32>
    %cst_12 = arith.constant -2.13374049E-4 : f32
    %32 = vector.broadcast %cst_12 : f32 to vector<16x128xf32>
    %33 = arith.addf %31, %32 : vector<16x128xf32>
    %34 = arith.mulf %33, %9 : vector<16x128xf32>
    %cst_13 = arith.constant -0.00168282702 : f32
    %35 = vector.broadcast %cst_13 : f32 to vector<16x128xf32>
    %36 = arith.addf %34, %35 : vector<16x128xf32>
    %37 = arith.mulf %36, %9 : vector<16x128xf32>
    %cst_14 = arith.constant -0.00737332925 : f32
    %38 = vector.broadcast %cst_14 : f32 to vector<16x128xf32>
    %39 = arith.addf %37, %38 : vector<16x128xf32>
    %40 = arith.mulf %39, %9 : vector<16x128xf32>
    %cst_15 = arith.constant -0.0142647391 : f32
    %41 = vector.broadcast %cst_15 : f32 to vector<16x128xf32>
    %42 = arith.addf %40, %41 : vector<16x128xf32>
    %43 = arith.divf %29, %42 : vector<16x128xf32>
    %cst_16 = arith.constant 1.000000e+00 : f32
    %44 = vector.broadcast %cst_16 : f32 to vector<16x128xf32>
    %45 = arith.addf %44, %43 : vector<16x128xf32>
    %46 = arith.mulf %2, %45 : vector<16x128xf32>
    %c0_17 = arith.constant 0 : index
    %c0_18 = arith.constant 0 : index
    %47 = vector.load %arg2[%c0_17, %c0_18] : memref<16x128xf32, #tpu.memory_space<vmem>>, vector<16x128xf32>
    tpu.vector_store %arg2[%c0_17, %c0_18], %46 {strides = array<i32>} : memref<16x128xf32, #tpu.memory_space<vmem>>, vector<16x128xf32>,
    return
  }
  func.func @transform_0(%arg0: i32) -> (i32, i32) {
    %c0_i32 = arith.constant 0 : i32
    %c0_i32_0 = arith.constant 0 : i32
    return %arg0, %c0_i32 : i32, i32
  }
  func.func @transform_1(%arg0: i32) -> (i32, i32) {
    %c0_i32 = arith.constant 0 : i32
    %c0_i32_0 = arith.constant 0 : i32
    return %arg0, %c0_i32 : i32, i32
  }
}

</mosaic_0001>

<llo_original>
// kernel: tpu_custom_call.1
$region0: #{tpu_custom_call.1}
  #allocation0 [shape = 'u32[]', space=smem, size = 0x4, offset = 0x4, fixed_abs, tag = 'smem constant byte address 0x4 - core index']
  #allocation1 [shape = 'u32[144,128]{1,0:T(1,128)}', space=vmem, size = 0x12000, scoped, tag = 'internal scratch']
  %s0 = inlined_call_operand.hbm [shape: f32[16,128], index: 0, kind: input, shape index: {}]
  %s1 = inlined_call_operand.hbm [shape: f32[16,128], index: 1, kind: output, shape index: {}]
  %s2 = sld [smem:[#allocation0]]
  $region18: #{tpu_custom_call.1} parent=0
    _
  %s4 = ssub.s32 1, %s2
  %s5 = scalar_select 0, %s4, %s2
  $region1: #{tpu_custom_call.1} parent=0
    #allocation2 [shape = 'u8[8192]{0}', space=vmem, size = 0x2000, scoped, tag = 'input window, operand 0, single buffered']
    #allocation3 [shape = 's32[1]{0}', space=sflag, size = 0x4, scoped, tag = 'scoped memory for tpu_custom_call.1']
    #allocation4 [shape = 's32[1]{0}', space=sflag, size = 0x4, scoped, tag = 'scoped memory for tpu_custom_call.1']
    #allocation5 [shape = 'u8[8192]{0}', space=vmem, size = 0x2000, scoped, tag = 'output window, operand 0, single buffered']
    %6 = vsyncpa [#allocation3], 0
    %7 = vsyncpa [#allocation4], 0
    // Predicated region
    $region2: #{tpu_custom_call.1} parent=1 // pred_check
      _
    $region3: #{tpu_custom_call.1} parent=1 // pred_check_branch
      %9 = sbr.rel (0) target = $region5
    $region4: #{tpu_custom_call.1} parent=1 // pred_region
      %s11 = ssub.s32 256, 256
      %12 = vsyncadd [#allocation3], %s11
      %s13 = sshll.u32 [#allocation2], 4
      %s14 = int_to_ptr.vmem [resolvable:$true] %s13
      %19 = dma.hbm_to_vmem [thread:$0]  %s0, 256, %s14, [#allocation3], 128, 128, 8
    $region5: #{tpu_custom_call.1} parent=1 // pred_fallthru
      _
    // Predicated region
    $region6: #{tpu_custom_call.1} parent=1 // pred_check
      _
    $region7: #{tpu_custom_call.1} parent=1 // pred_check_branch
      %21 = sbr.rel (0) target = $region9
    $region8: #{tpu_custom_call.1} parent=1 // pred_region
      %22 = dma.done [#allocation3], 256
    $region9: #{tpu_custom_call.1} parent=1 // pred_fallthru
      _
    %v23 = vld [vmem:[#allocation2] sm:$0xff]
    %v24 = vld [vmem:[#allocation2 + $0x8] sm:$0xff]
    %v25 = vmul.f32 %v23, 0.5
    %v26 = vmul.f32 %v24, 0.5
    %v27 = vmul.f32 %v23, 0.70710677
    %v28 = vmul.f32 %v24, 0.70710677
    %v29 = vmax.f32 %v27, -4.0
    %v30 = vmax.f32 %v28, -4.0
    %v31 = vmin.f32 %v29, 4.0
    %v32 = vmin.f32 %v30, 4.0
    %v33 = vmul.f32 %v31, %v31
    %v34 = vmul.f32 %v32, %v32
    %v35 = vmul.f32 %v33, -2.7261424e-10
    %v36 = vmul.f32 %v34, -2.7261424e-10
    %v37 = vadd.f32 %v35, 2.7706815e-08
    %v38 = vadd.f32 %v36, 2.7706815e-08
    %v39 = vmul.f32 %v37, %v33
    %v40 = vmul.f32 %v38, %v34
    %v41 = vadd.f32 %v39, -2.101024e-06
    %v42 = vadd.f32 %v40, -2.101024e-06
    %v43 = vmul.f32 %v41, %v33
    %v44 = vmul.f32 %v42, %v34
    %v45 = vadd.f32 %v43, -5.6925062e-05
    %v46 = vadd.f32 %v44, -5.6925062e-05
    %v47 = vmul.f32 %v45, %v33
    %v48 = vmul.f32 %v46, %v34
    %v49 = vadd.f32 %v47, -0.00073499064
    %v50 = vadd.f32 %v48, -0.00073499064
    %v51 = vmul.f32 %v49, %v33
    %v52 = vmul.f32 %v50, %v34
    %v53 = vadd.f32 %v51, -0.0029546
    %v54 = vadd.f32 %v52, -0.0029546
    %v55 = vmul.f32 %v53, %v33
    %v56 = vmul.f32 %v54, %v34
    %v57 = vadd.f32 %v55, -0.016096033
    %v58 = vadd.f32 %v56, -0.016096033
    %v59 = vmul.f32 %v57, %v31
    %v60 = vmul.f32 %v58, %v32
    %v61 = vmul.f32 %v33, -1.45660715e-05
    %v62 = vmul.f32 %v34, -1.45660715e-05
    %v63 = vadd.f32 %v61, -0.00021337405
    %v64 = vadd.f32 %v62, -0.00021337405
    %v65 = vmul.f32 %v63, %v33
    %v66 = vmul.f32 %v64, %v34
    %v67 = vadd.f32 %v65, -0.001682827
    %v68 = vadd.f32 %v66, -0.001682827
    %v69 = vmul.f32 %v67, %v33
    %v70 = vmul.f32 %v68, %v34
    %v71 = vadd.f32 %v69, -0.0073733293
    %v72 = vadd.f32 %v70, -0.0073733293
    %v73 = vmul.f32 %v71, %v33
    %v74 = vmul.f32 %v72, %v34
    %v75 = vadd.f32 %v73, -0.014264739
    %v76 = vadd.f32 %v74, -0.014264739
    %v77 = vrcp.pop %v75
    %v78 = vmul.f32 %v59, %v77
    %v79 = vrcp.pop %v76
    %v80 = vmul.f32 %v60, %v79
    %v81 = vadd.f32 %v78, 1.0
    %v82 = vadd.f32 %v80, 1.0
    %v83 = vmul.f32 %v25, %v81
    %v84 = vmul.f32 %v26, %v82
    %85 = vst [vmem:[#allocation5] sm:$0xff] %v83
    %86 = vst [vmem:[#allocation5 + $0x8] sm:$0xff] %v84
    // Predicated region
    $region10: #{tpu_custom_call.1} parent=1 // pred_check
      _
    $region11: #{tpu_custom_call.1} parent=1 // pred_check_branch
      %88 = sbr.rel (0) target = $region13
    $region12: #{tpu_custom_call.1} parent=1 // pred_region
      %s90 = ssub.s32 256, 256
      %91 = vsyncadd [#allocation4], %s90
      %s92 = sshll.u32 [#allocation5], 4
      %s93 = int_to_ptr.vmem [resolvable:$true] %s92
      %98 = dma.vmem_to_hbm [thread:$0]  %s93, 256, %s1, [#allocation4], 128, 128, 8
    $region13: #{tpu_custom_call.1} parent=1 // pred_fallthru
      _
    // Predicated region
    $region14: #{tpu_custom_call.1} parent=1 // pred_check
      _
    $region15: #{tpu_custom_call.1} parent=1 // pred_check_branch
      %100 = sbr.rel (0) target = $region17
    $region16: #{tpu_custom_call.1} parent=1 // pred_region
      %101 = dma.done [#allocation4], 256
    $region17: #{tpu_custom_call.1} parent=1 // pred_fallthru
      _
    %102 = vsyncpa [#allocation3], 1
    %103 = vsyncpa [#allocation4], 1

</llo_original>
